<compile_context>
chip_gen: v6e
topology: v6e:2x2x1
jax: 0.10.0
libtpu: 0.0.40
codegen_flags: <defaults>
</compile_context>

<pallas_src>
import functools

import jax
import jax.numpy as jnp
from jax.experimental import pallas as pl
from jax.experimental.pallas import tpu as pltpu


def _round_up(x: int, m: int) -> int:
    return (x + m - 1) // m * m


def _label_smoothing_kernel(pred_ref, tgt_ref, out_ref, *,
                            smoothing: float, total_rows: int,
                            block_rows: int, need_mask: bool):
    """One grid step: (TB, C) tile -> one lane-dense partial-sum block."""
    confidence = 1.0 - smoothing

    x = pred_ref[...].astype(jnp.float32)   # (TB, C)
    t = tgt_ref[...].astype(jnp.float32)    # (TB, C)
    c = x.shape[-1]

    # Row statistics on the raw tile; only exp(x - m) materializes a shifted
    # (TB, C) temp.  Numerically-stable log-softmax pieces:
    #   logprobs = (x - m) - lse
    #   nll      = -sum(logprobs * t) = lse*sum_t - (dot_xt - m*sum_t)
    #   smooth   = -mean(logprobs)    = lse - (sum_x/C - m)
    m = jnp.max(x, axis=-1, keepdims=True)                            # (TB, 1)
    sum_x = jnp.sum(x, axis=-1, keepdims=True)                        # (TB, 1)
    sum_t = jnp.sum(t, axis=-1, keepdims=True)                        # (TB, 1)
    dot_xt = jnp.sum(x * t, axis=-1, keepdims=True)                   # (TB, 1)
    lse = jnp.log(jnp.sum(jnp.exp(x - m), axis=-1, keepdims=True))    # (TB, 1)

    nll_loss = lse * sum_t - (dot_xt - m * sum_t)                     # (TB, 1)
    smooth_loss = lse - (sum_x * (1.0 / c) - m)                       # (TB, 1)
    row_loss = confidence * nll_loss + smoothing * smooth_loss        # (TB, 1)

    if need_mask:
        # Ragged last block: zero rows beyond total_rows (select -> garbage
        # rows, even NaN/Inf ones, cannot propagate).
        i = pl.program_id(0)
        row_ids = i * block_rows + jax.lax.broadcasted_iota(
            jnp.int32, (block_rows, 1), 0)
        row_loss = jnp.where(row_ids < total_rows, row_loss, 0.0)

    partial = jnp.sum(row_loss)                                       # scalar
    # Lane-dense full-vreg store; wrapper reads [block, 0, 0].
    out_ref[...] = jnp.broadcast_to(partial, out_ref.shape)


def label_smoothing_loss(predicted: jax.Array, target: jax.Array,
                         smoothing: float = 0.0,
                         block_bytes: int = 1 << 20) -> jax.Array:
    """Pallas implementation of LabelSmoothingLoss.forward (mean over rows)."""
    assert predicted.shape == target.shape
    c = predicted.shape[-1]
    pred2d = predicted.reshape(-1, c)
    tgt2d = target.reshape(-1, c)
    b = pred2d.shape[0]

    # Row tile sized against ~block_bytes per input block in the *actual* HBM
    # dtype (multiple of 8 sublanes).  The kernel widens to f32 internally.
    in_itemsize = max(pred2d.dtype.itemsize, tgt2d.dtype.itemsize)
    tb = max(8, (block_bytes // (c * in_itemsize)) // 8 * 8)
    # Megacore (v7x): keep >= ~8 blocks when B is large so the "parallel"
    # grid axis can be sharded across both TensorCores.
    tb = min(tb, max(8, _round_up(pl.cdiv(b, 8), 8)))
    # Never exceed the data.
    tb = min(tb, _round_up(b, 8))

    n_blocks = pl.cdiv(b, tb)          # ragged last block handled in-kernel
    need_mask = (b % tb) != 0

    # Per-step VMEM working-set estimate: double-buffered inputs + ~4 (TB, C)
    # f32 intermediates + margin.  Only raise the scoped-VMEM limit when the
    # default (16 MiB on v5e, 32 MiB on v6e/v7x) might not cover it.
    est = (2 * tb * c * (pred2d.dtype.itemsize + tgt2d.dtype.itemsize)
           + 4 * tb * c * 4 + (2 << 20))
    compiler_kwargs = {}
    if est > (16 << 20):
        compiler_kwargs["vmem_limit_bytes"] = int(min(est, 120 << 20))

    kernel = functools.partial(
        _label_smoothing_kernel,
        smoothing=float(smoothing),
        total_rows=b,
        block_rows=tb,
        need_mask=need_mask,
    )

    partials = pl.pallas_call(
        kernel,
        out_shape=jax.ShapeDtypeStruct((n_blocks, 8, 128), jnp.float32),
        grid_spec=pltpu.PrefetchScalarGridSpec(
            num_scalar_prefetch=0,
            grid=(n_blocks,),
            in_specs=[
                pl.BlockSpec((tb, c), lambda i: (i, 0)),
                pl.BlockSpec((tb, c), lambda i: (i, 0)),
            ],
            out_specs=pl.BlockSpec((1, 8, 128), lambda i: (i, 0, 0)),
        ),
        compiler_params=pltpu.CompilerParams(
            # Fully parallel grid: per-block partial sums, no carried
            # accumulator -> both TensorCores get used on v7x.
            dimension_semantics=("parallel",),
            **compiler_kwargs),
    )(pred2d, tgt2d)

    # Tiny (n_blocks,) reduction + mean in plain XLA (multiply, no divide).
    return jnp.sum(partials[:, 0, 0]) * jnp.float32(1.0 / b)


def _reference(predicted, target, smoothing):
    predicted = predicted.astype(jnp.float32)
    target = target.astype(jnp.float32)
    logprobs = jax.nn.log_softmax(predicted, axis=-1)
    nll = jnp.sum(-logprobs * target, axis=-1)
    smooth = -jnp.mean(logprobs, axis=-1)
    loss = (1.0 - smoothing) * nll + smoothing * smooth
    return jnp.mean(loss)


if __name__ == "__main__":
    key = jax.random.PRNGKey(0)
    k1, k2, k3, k4 = jax.random.split(key, 4)

    smoothing = 0.1

    # Case 1: ragged row count (30 rows, not a multiple of TB) + one-hot target.
    B, S, C = 6, 5, 128
    predicted = jax.random.normal(k1, (B, S, C), dtype=jnp.float32)
    labels = jax.random.randint(k2, (B, S), 0, C)
    target = jax.nn.one_hot(labels, C, dtype=jnp.float32)

    loss = jax.block_until_ready(
        label_smoothing_loss(predicted, target, smoothing=smoothing))
    ref = _reference(predicted, target, smoothing)
    assert jnp.allclose(loss, ref, rtol=1e-5, atol=1e-5), (loss, ref)

    # Case 2: soft (non-one-hot) targets — dense-target semantics kept.
    soft_target = jax.nn.softmax(
        jax.random.normal(k3, (B, S, C), dtype=jnp.float32), axis=-1)
    loss2 = jax.block_until_ready(
        label_smoothing_loss(predicted, soft_target, smoothing=smoothing))
    ref2 = _reference(predicted, soft_target, smoothing)
    assert jnp.allclose(loss2, ref2, rtol=1e-5, atol=1e-5), (loss2, ref2)

    # Case 3: divisible row count (128 rows) — exercises the unmasked path.
    B2, S2 = 2, 64
    pred3 = jax.random.normal(k4, (B2, S2, C), dtype=jnp.float32)
    labels3 = jax.random.randint(k2, (B2, S2), 0, C)
    tgt3 = jax.nn.one_hot(labels3, C, dtype=jnp.float32)
    loss3 = jax.block_until_ready(
        label_smoothing_loss(pred3, tgt3, smoothing=smoothing))
    ref3 = _reference(pred3, tgt3, smoothing)
    assert jnp.allclose(loss3, ref3, rtol=1e-5, atol=1e-5), (loss3, ref3)

    print("KERNEL_OK")
</pallas_src>

<mosaic_0001>
module attributes {stable_mosaic.version = 11 : i64} {
  func.func @_label_smoothing_kernel(%arg0: i32, %arg1: memref<8x128xf32, #tpu.memory_space<vmem>>, %arg2: memref<8x128xf32, #tpu.memory_space<vmem>>, %arg3: memref<1x8x128xf32, #tpu.memory_space<vmem>>) attributes {dimension_semantics = [#tpu.dimension_semantics<parallel>], iteration_bounds = array<i64: 4>, scalar_prefetch = 0 : i64, scratch_operands = 0 : i64, tpu.core_type = #tpu.core_type<tc>, window_params = [{transform_indices = @transform_0, window_bounds = array<i64: 8, 128>}, {transform_indices = @transform_1, window_bounds = array<i64: 8, 128>}, {transform_indices = @transform_2, window_bounds = array<i64: 1, 8, 128>}]} {
    %c0 = arith.constant 0 : index
    %c0_0 = arith.constant 0 : index
    %0 = vector.load %arg1[%c0, %c0_0] : memref<8x128xf32, #tpu.memory_space<vmem>>, vector<8x128xf32>
    %c0_1 = arith.constant 0 : index
    %c0_2 = arith.constant 0 : index
    %1 = vector.load %arg2[%c0_1, %c0_2] : memref<8x128xf32, #tpu.memory_space<vmem>>, vector<8x128xf32>
    %cst = arith.constant dense<0xFF800000> : vector<8xf32>
    %2 = vector.multi_reduction <maximumf>, %0, %cst [1] : vector<8x128xf32> to vector<8xf32>
    %3 = vector.shape_cast %2 : vector<8xf32> to vector<8x1xf32>
    %cst_3 = arith.constant dense<0.000000e+00> : vector<8xf32>
    %4 = vector.multi_reduction <add>, %0, %cst_3 [1] : vector<8x128xf32> to vector<8xf32>
    %5 = vector.shape_cast %4 : vector<8xf32> to vector<8x1xf32>
    %cst_4 = arith.constant dense<0.000000e+00> : vector<8xf32>
    %6 = vector.multi_reduction <add>, %1, %cst_4 [1] : vector<8x128xf32> to vector<8xf32>
    %7 = vector.shape_cast %6 : vector<8xf32> to vector<8x1xf32>
    %8 = arith.mulf %0, %1 : vector<8x128xf32>
    %cst_5 = arith.constant dense<0.000000e+00> : vector<8xf32>
    %9 = vector.multi_reduction <add>, %8, %cst_5 [1] : vector<8x128xf32> to vector<8xf32>
    %10 = vector.shape_cast %9 : vector<8xf32> to vector<8x1xf32>
    %11 = vector.broadcast %3 : vector<8x1xf32> to vector<8x128xf32>
    %12 = arith.subf %0, %11 : vector<8x128xf32>
    %13 = math.exp %12 : vector<8x128xf32>
    %cst_6 = arith.constant dense<0.000000e+00> : vector<8xf32>
    %14 = vector.multi_reduction <add>, %13, %cst_6 [1] : vector<8x128xf32> to vector<8xf32>
    %15 = vector.shape_cast %14 : vector<8xf32> to vector<8x1xf32>
    %16 = math.log %15 : vector<8x1xf32>
    %17 = arith.mulf %16, %7 : vector<8x1xf32>
    %18 = arith.mulf %3, %7 : vector<8x1xf32>
    %19 = arith.subf %10, %18 : vector<8x1xf32>
    %20 = arith.subf %17, %19 : vector<8x1xf32>
    %cst_7 = arith.constant 7.812500e-03 : f32
    %21 = vector.broadcast %cst_7 : f32 to vector<8x1xf32>
    %22 = arith.mulf %5, %21 : vector<8x1xf32>
    %23 = arith.subf %22, %3 : vector<8x1xf32>
    %24 = arith.subf %16, %23 : vector<8x1xf32>
    %cst_8 = arith.constant 0.899999976 : f32
    %25 = vector.broadcast %cst_8 : f32 to vector<8x1xf32>
    %26 = arith.mulf %25, %20 : vector<8x1xf32>
    %cst_9 = arith.constant 1.000000e-01 : f32
    %27 = vector.broadcast %cst_9 : f32 to vector<8x1xf32>
    %28 = arith.mulf %27, %24 : vector<8x1xf32>
    %29 = arith.addf %26, %28 : vector<8x1xf32>
    %c8_i32 = arith.constant 8 : i32
    %30 = arith.muli %arg0, %c8_i32 : i32
    %31 = tpu.iota {dimensions = array<i32: 0>} : vector<8x1xi32>
    %32 = vector.broadcast %30 : i32 to vector<8x1xi32>
    %33 = arith.addi %32, %31 : vector<8x1xi32>
    %c30_i32 = arith.constant 30 : i32
    %34 = vector.broadcast %c30_i32 : i32 to vector<8x1xi32>
    %35 = arith.cmpi slt, %33, %34 : vector<8x1xi32>
    %cst_10 = arith.constant 0.000000e+00 : f32
    %36 = vector.broadcast %cst_10 : f32 to vector<8x1xf32>
    %37 = arith.select %35, %29, %36 : vector<8x1xi1>, vector<8x1xf32>
    %38 = vector.shape_cast %37 : vector<8x1xf32> to vector<1x8x1xf32>
    %cst_11 = arith.constant dense<0.000000e+00> : vector<1xf32>
    %39 = vector.multi_reduction <add>, %38, %cst_11 [1, 2] : vector<1x8x1xf32> to vector<1xf32>
    %40 = vector.shape_cast %39 : vector<1xf32> to vector<1x1x1xf32>
    %41 = vector.extract %40[0, 0, 0] : f32 from vector<1x1x1xf32>
    %42 = vector.broadcast %41 : f32 to vector<1x8x128xf32>
    %c0_12 = arith.constant 0 : index
    %c0_13 = arith.constant 0 : index
    %c0_14 = arith.constant 0 : index
    %43 = vector.load %arg3[%c0_12, %c0_13, %c0_14] : memref<1x8x128xf32, #tpu.memory_space<vmem>>, vector<1x8x128xf32>
    tpu.vector_store %arg3[%c0_12, %c0_13, %c0_14], %42 {strides = array<i32>} : memref<1x8x128xf32, #tpu.memory_space<vmem>>, vector<1x8x128xf32>,
    return
  }
  func.func @transform_0(%arg0: i32) -> (i32, i32) {
    %c0_i32 = arith.constant 0 : i32
    %c0_i32_0 = arith.constant 0 : i32
    return %arg0, %c0_i32 : i32, i32
  }
  func.func @transform_1(%arg0: i32) -> (i32, i32) {
    %c0_i32 = arith.constant 0 : i32
    %c0_i32_0 = arith.constant 0 : i32
    return %arg0, %c0_i32 : i32, i32
  }
  func.func @transform_2(%arg0: i32) -> (i32, i32, i32) {
    %c0_i32 = arith.constant 0 : i32
    %c0_i32_0 = arith.constant 0 : i32
    %c0_i32_1 = arith.constant 0 : i32
    return %arg0, %c0_i32, %c0_i32_0 : i32, i32, i32
  }
}

</mosaic_0001>

<llo_original>
// kernel: tpu_custom_call.1
$region0: #{tpu_custom_call.1}
  #allocation0 [shape = 'u32[]', space=smem, size = 0x4, offset = 0x4, fixed_abs, tag = 'smem constant byte address 0x4 - core index']
  #allocation1 [shape = 'u32[144,128]{1,0:T(1,128)}', space=vmem, size = 0x12000, scoped, tag = 'internal scratch']
  %s0 = inlined_call_operand.hbm [shape: f32[30,128], index: 0, kind: input, shape index: {}]
  %s1 = inlined_call_operand.hbm [shape: f32[30,128], index: 1, kind: input, shape index: {}]
  %s2 = inlined_call_operand.hbm [shape: f32[4,8,128], index: 2, kind: output, shape index: {}]
  %s3 = sld [smem:[#allocation0]]
  $region49: #{tpu_custom_call.1} parent=0
    _
  %s5 = ssub.s32 1, %s3
  %s6 = scalar_select 0, %s5, %s3
  $region1: #{tpu_custom_call.1} parent=0
    #allocation2 [shape = 'u8[8192]{0}', space=vmem, size = 0x2000, scoped, tag = 'input window, operand 0']
    #allocation3 [shape = 's32[2]{0}', space=sflag, size = 0x8, scoped, tag = 'scoped memory for tpu_custom_call.1']
    #allocation4 [shape = 's32[2]{0}', space=sflag, size = 0x8, scoped, tag = 'scoped memory for tpu_custom_call.1']
    #allocation5 [shape = 'u8[8192]{0}', space=vmem, size = 0x2000, scoped, tag = 'input window, operand 1']
    #allocation6 [shape = 's32[2]{0}', space=sflag, size = 0x8, scoped, tag = 'scoped memory for tpu_custom_call.1']
    #allocation7 [shape = 'u8[8192]{0}', space=vmem, size = 0x2000, scoped, tag = 'output window, operand 0']
    %7 = vsyncpa [#allocation3], 0
    %s8 = scalar_lea.sflag [#allocation3], 1
    %9 = vsyncpa %s8, 0
    %10 = vsyncpa [#allocation6], 0
    %s11 = scalar_lea.sflag [#allocation6], 1
    %12 = vsyncpa %s11, 0
    %13 = vsyncpa [#allocation4], 0
    %s14 = scalar_lea.sflag [#allocation4], 1
    %15 = vsyncpa %s14, 0
    loop: start=0, step=1, limit=6
    $region2: #{tpu_custom_call.1} parent=1 // loop_pre_header
      _
    $region3: #{tpu_custom_call.1} parent=1 // loop_header
      %s17 = sphi 0, %s21
      %p18 = scmp.ge.s32.totalorder %s17, 6
      %s27 = sphi 0, %s29
      %s30 = sphi 0, %s27
      %s31 = sphi 0, %s30
      %s47 = sphi 0, %s31
      %s53 = sphi 0, %s55
      %s56 = sphi 0, %s53
      %s57 = sphi 0, %s56
      %s73 = sphi 0, %s57
      %s79 = sphi 0, %s81
      %s82 = sphi 0, %s79
      %s83 = sphi 0, %s82
      %s99 = sphi 0, %s83
    $region4: #{tpu_custom_call.1} parent=1 // loop_header_branch
      %20 = sbr.rel (%p18) target = $region8
    $region5: #{tpu_custom_call.1} parent=1 // loop_body
      %s22 = ssub.s32 %s17, 1
      %s23 = ssub.s32 %s17, 2
      %s24 = sadd.s32 %s17, 1
      %s25 = ssub.s32 %s17, %s24
      %p26 = scmp.eq.s32.totalorder %s25, 0
      %s28 = sadd.s32 %s27, 1
      %s29 = scalar_select %p26, %s27, %s28
      %p32 = pneg %p26
      %p33 = scmp.eq.s32.totalorder %s17, 3
      %p34 = por %p32, %p33
      %p35 = scmp.ne.s32.totalorder %s27, %s30
      %p36 = scmp.eq.s32.totalorder %s17, 0
      %p37 = por %p35, %p36
      %p38 = scmp.ne.s32.totalorder %s27, %s30
      %p39 = scmp.eq.s32.totalorder %s22, 3
      %p40 = por %p38, %p39
      %p41 = scmp.ne.s32.totalorder %s30, %s31
      %p42 = scmp.eq.s32.totalorder %s22, 0
      %p43 = por %p41, %p42
      %p44 = scmp.ne.s32.totalorder %s30, %s31
      %p45 = scmp.eq.s32.totalorder %s23, 3
      %p46 = por %p44, %p45
      %p48 = scmp.ne.s32.totalorder %s31, %s47
      %p49 = scmp.eq.s32.totalorder %s23, 0
      %p50 = por %p48, %p49
      %s51 = ssub.s32 %s17, %s24
      %p52 = scmp.eq.s32.totalorder %s51, 0
      %s54 = sadd.s32 %s53, 1
      %s55 = scalar_select %p52, %s53, %s54
      %p58 = pneg %p52
      %p59 = scmp.eq.s32.totalorder %s17, 3
      %p60 = por %p58, %p59
      %p61 = scmp.ne.s32.totalorder %s53, %s56
      %p62 = scmp.eq.s32.totalorder %s17, 0
      %p63 = por %p61, %p62
      %p64 = scmp.ne.s32.totalorder %s53, %s56
      %p65 = scmp.eq.s32.totalorder %s22, 3
      %p66 = por %p64, %p65
      %p67 = scmp.ne.s32.totalorder %s56, %s57
      %p68 = scmp.eq.s32.totalorder %s22, 0
      %p69 = por %p67, %p68
      %p70 = scmp.ne.s32.totalorder %s56, %s57
      %p71 = scmp.eq.s32.totalorder %s23, 3
      %p72 = por %p70, %p71
      %p74 = scmp.ne.s32.totalorder %s57, %s73
      %p75 = scmp.eq.s32.totalorder %s23, 0
      %p76 = por %p74, %p75
      %s77 = ssub.s32 %s17, %s24
      %p78 = scmp.eq.s32.totalorder %s77, 0
      %s80 = sadd.s32 %s79, 1
      %s81 = scalar_select %p78, %s79, %s80
      %p84 = pneg %p78
      %p85 = scmp.eq.s32.totalorder %s17, 3
      %p86 = por %p84, %p85
      %p87 = scmp.ne.s32.totalorder %s79, %s82
      %p88 = scmp.eq.s32.totalorder %s17, 0
      %p89 = por %p87, %p88
      %p90 = scmp.ne.s32.totalorder %s79, %s82
      %p91 = scmp.eq.s32.totalorder %s22, 3
      %p92 = por %p90, %p91
      %p93 = scmp.ne.s32.totalorder %s82, %s83
      %p94 = scmp.eq.s32.totalorder %s22, 0
      %p95 = por %p93, %p94
      %p96 = scmp.ne.s32.totalorder %s82, %s83
      %p97 = scmp.eq.s32.totalorder %s23, 3
      %p98 = por %p96, %p97
      %p100 = scmp.ne.s32.totalorder %s83, %s99
      %p101 = scmp.eq.s32.totalorder %s23, 0
      %p102 = por %p100, %p101
      %p103 = scmp.le.s32.totalorder 1, %s17
      %p104 = scmp.lt.s32.totalorder %s17, 5
      %p105 = pnand %p103, %p104
      %p106 = pneg %p105
      // Predicated region
      $region9: #{tpu_custom_call.1} parent=5 // pred_check
        _
      $region10: #{tpu_custom_call.1} parent=5 // pred_check_branch
        %108 = sbr.rel (%p105) target = $region12
      $region11: #{tpu_custom_call.1} parent=5 // pred_region
        %s109 = ssub.s32 %s17, 1
      $region12: #{tpu_custom_call.1} parent=5 // pred_fallthru
        _
      %p110 = scmp.lt.s32.totalorder %s17, 4
      // Predicated region
      $region13: #{tpu_custom_call.1} parent=5 // pred_check
        %p111 = pneg %p110
      $region14: #{tpu_custom_call.1} parent=5 // pred_check_branch
        %113 = sbr.rel (%p111) target = $region16
      $region15: #{tpu_custom_call.1} parent=5 // pred_region
        // Predicated region
        $region17: #{tpu_custom_call.1} parent=15 // pred_check
          %p114 = pneg %p37
        $region18: #{tpu_custom_call.1} parent=15 // pred_check_branch
          %116 = sbr.rel (%p114) target = $region20
        $region19: #{tpu_custom_call.1} parent=15 // pred_region
          %s117 = sand.u32 %s27, 1
          %s118 = scalar_lea.sflag [#allocation3], %s117
          %s119 = sand.u32 %s27, 1
          %s120 = smul.addr %s119, 8
          %s121 = scalar_lea.vmem [#allocation2], %s120
          %s123 = ssub.s32 128, 128
          %124 = vsyncadd %s118, %s123
          %s125 = smul.addr %s17, 128
          %s126 = scalar_lea.hbm %s0, %s125
          %s128 = sshll.u32 %s121, 4
          %s129 = int_to_ptr.vmem [resolvable:$true] %s128
          %131 = dma.hbm_to_vmem [thread:$0]  %s126, 128, %s129, %s118
        $region20: #{tpu_custom_call.1} parent=15 // pred_fallthru
          _
        // Predicated region
        $region21: #{tpu_custom_call.1} parent=15 // pred_check
          %p132 = pneg %p63
        $region22: #{tpu_custom_call.1} parent=15 // pred_check_branch
          %134 = sbr.rel (%p132) target = $region24
        $region23: #{tpu_custom_call.1} parent=15 // pred_region
          %s135 = sand.u32 %s53, 1
          %s136 = scalar_lea.sflag [#allocation6], %s135
          %s137 = sand.u32 %s53, 1
          %s138 = smul.addr %s137, 8
          %s139 = scalar_lea.vmem [#allocation5], %s138
          %s141 = ssub.s32 128, 128
          %142 = vsyncadd %s136, %s141
          %s143 = smul.addr %s17, 128
          %s144 = scalar_lea.hbm %s1, %s143
          %s146 = sshll.u32 %s139, 4
          %s147 = int_to_ptr.vmem [resolvable:$true] %s146
          %149 = dma.hbm_to_vmem [thread:$0]  %s144, 128, %s147, %s136
        $region24: #{tpu_custom_call.1} parent=15 // pred_fallthru
          _
      $region16: #{tpu_custom_call.1} parent=5 // pred_fallthru
        _
      %p150 = scmp.le.s32.totalorder 1, %s17
      %p151 = scmp.lt.s32.totalorder %s17, 5
      %p152 = pnand %p150, %p151
      %p153 = pneg %p152
      // Predicated region
      $region25: #{tpu_custom_call.1} parent=5 // pred_check
        _
      $region26: #{tpu_custom_call.1} parent=5 // pred_check_branch
        %155 = sbr.rel (%p152) target = $region28
      $region27: #{tpu_custom_call.1} parent=5 // pred_region
        %s156 = ssub.s32 %s17, 1
        %s157 = sand.u32 %s30, 1
        %s158 = scalar_lea.sflag [#allocation3], %s157
        %s159 = sand.u32 %s30, 1
        %s160 = smul.addr %s159, 8
        %s161 = scalar_lea.vmem [#allocation2], %s160
        // Predicated region
        $region29: #{tpu_custom_call.1} parent=27 // pred_check
          %p162 = pneg %p43
        $region30: #{tpu_custom_call.1} parent=27 // pred_check_branch
          %164 = sbr.rel (%p162) target = $region32
        $region31: #{tpu_custom_call.1} parent=27 // pred_region
          %165 = dma.done %s158, 128
        $region32: #{tpu_custom_call.1} parent=27 // pred_fallthru
          _
        %s166 = sand.u32 %s56, 1
        %s167 = scalar_lea.sflag [#allocation6], %s166
        %s168 = sand.u32 %s56, 1
        %s169 = smul.addr %s168, 8
        %s170 = scalar_lea.vmem [#allocation5], %s169
        // Predicated region
        $region33: #{tpu_custom_call.1} parent=27 // pred_check
          %p171 = pneg %p69
        $region34: #{tpu_custom_call.1} parent=27 // pred_check_branch
          %173 = sbr.rel (%p171) target = $region36
        $region35: #{tpu_custom_call.1} parent=27 // pred_region
          %174 = dma.done %s167, 128
        $region36: #{tpu_custom_call.1} parent=27 // pred_fallthru
          _
        %s175 = sand.u32 %s30, 1
        %s176 = scalar_lea.sflag [#allocation3], %s175
        %s177 = sand.u32 %s30, 1
        %s178 = smul.addr %s177, 8
        %s179 = scalar_lea.vmem [#allocation2], %s178
        %p180 = pneg %p43
        %p181 = pneg %p40
        %s182 = sand.u32 %s56, 1
        %s183 = scalar_lea.sflag [#allocation6], %s182
        %s184 = sand.u32 %s56, 1
        %s185 = smul.addr %s184, 8
        %s186 = scalar_lea.vmem [#allocation5], %s185
        %p187 = pneg %p69
        %p188 = pneg %p66
        %p189 = pneg %p95
        %p190 = pneg %p92
        %s191 = sand.u32 %s82, 1
        %s192 = scalar_lea.sflag [#allocation4], %s191
        %s193 = sand.u32 %s82, 1
        %s194 = smul.addr %s193, 8
        %s195 = scalar_lea.vmem [#allocation7], %s194
        %v196 = vld [vmem:[%s161] sm:$0xff]
        %v197 = vld [vmem:[%s170] sm:$0xff]
        %198 = vmax.xlane.f32.xlu0 %v196
        %v199 = vpop.xlane.xlu0 %198
        %200 = vadd.xlane.f32.xlu0 %v196
        %v201 = vpop.xlane.xlu0 %200
        %202 = vadd.xlane.f32.xlu0 %v197
        %v203 = vpop.xlane.xlu0 %202
        %v204 = vmul.f32 %v196, %v197
        %205 = vadd.xlane.f32.xlu0 %v204
        %v206 = vpop.xlane.xlu0 %205
        %v207 = vsub.f32 %v196, %v199
        %v208 = vmul.f32 %v207, 1.442695
        %v209 = vpow.pop %v208
        %210 = vadd.xlane.f32.xlu0 %v209
        %v211 = vpop.xlane.xlu0 %210
        %v212 = vlog2.pop %v211
        %v213 = vmul.f32 %v212, 0.6931472
        %v214 = vmul.f32 %v213, %v203
        %v215 = vmul.f32 %v199, %v203
        %v216 = vsub.f32 %v206, %v215
        %v217 = vsub.f32 %v214, %v216
        %v218 = vmul.f32 %v201, 0.0078125
        %v219 = vsub.f32 %v218, %v199
        %v220 = vsub.f32 %v213, %v219
        %v221 = vmul.f32 %v217, 0.9
        %v222 = vmul.f32 %v220, 0.1
        %v223 = vadd.f32 %v221, %v222
        %s224 = smul.u32 %s22, 8
        %v225 = vlaneseq
        %v226 = vshrl.u32 %v225, 7
        %v227 = vstv %s224
        %v228 = vadd.s32 %v227, %v226
        %vm229 = vcmp.lt.s32.totalorder %v228, 30
        %v230 = vsel %vm229, %v223, 0.0
        %vm231 = vcmask 7168
        %v232 = vsel %vm231, %v230, 0.0
        %233 = vadd.xlane.f32.xlu0 %v232
        %v234 = vpop.xlane.xlu0 %233
        %v235 = vrot.slane %v234, 4
        %v236 = vadd.f32 %v234, %v235
        %v237 = vrot.slane %v236, 2
        %v238 = vadd.f32 %v236, %v237
        %v239 = vrot.slane %v238, 1
        %v240 = vadd.f32 %v238, %v239
        %s241 = vtos %v240
        %v242 = vstv %s241
        %243 = vst [vmem:[%s195] sm:$0xff] %v242
        %s244 = sand.u32 %s82, 1
        %s245 = scalar_lea.sflag [#allocation4], %s244
        %s246 = sand.u32 %s82, 1
        %s247 = smul.addr %s246, 8
        %s248 = scalar_lea.vmem [#allocation7], %s247
        // Predicated region
        $region37: #{tpu_custom_call.1} parent=27 // pred_check
          %p249 = pneg %p92
        $region38: #{tpu_custom_call.1} parent=27 // pred_check_branch
          %251 = sbr.rel (%p249) target = $region40
        $region39: #{tpu_custom_call.1} parent=27 // pred_region
          %s253 = ssub.s32 128, 128
          %254 = vsyncadd %s245, %s253
          %s255 = smul.addr %s22, 128
          %s256 = scalar_lea.hbm %s2, %s255
          %s258 = sshll.u32 %s248, 4
          %s259 = int_to_ptr.vmem [resolvable:$true] %s258
          %261 = dma.vmem_to_hbm [thread:$0]  %s259, 128, %s256, %s245
        $region40: #{tpu_custom_call.1} parent=27 // pred_fallthru
          _
      $region28: #{tpu_custom_call.1} parent=5 // pred_fallthru
        _
      %p262 = scmp.le.s32.totalorder 2, %s17
      // Predicated region
      $region41: #{tpu_custom_call.1} parent=5 // pred_check
        %p263 = pneg %p262
      $region42: #{tpu_custom_call.1} parent=5 // pred_check_branch
        %265 = sbr.rel (%p263) target = $region44
      $region43: #{tpu_custom_call.1} parent=5 // pred_region
        %s266 = ssub.s32 %s17, 2
        // Predicated region
        $region45: #{tpu_custom_call.1} parent=43 // pred_check
          %p267 = pneg %p98
        $region46: #{tpu_custom_call.1} parent=43 // pred_check_branch
          %269 = sbr.rel (%p267) target = $region48
        $region47: #{tpu_custom_call.1} parent=43 // pred_region
          %s270 = sand.u32 %s83, 1
          %s271 = scalar_lea.sflag [#allocation4], %s270
          %s272 = sand.u32 %s83, 1
          %s273 = smul.addr %s272, 8
          %s274 = scalar_lea.vmem [#allocation7], %s273
          %275 = dma.done %s271, 128
        $region48: #{tpu_custom_call.1} parent=43 // pred_fallthru
          _
      $region44: #{tpu_custom_call.1} parent=5 // pred_fallthru
        _
    $region6: #{tpu_custom_call.1} parent=1 // loop_footer
      %s21 = sadd.s32 1, %s17
    $region7: #{tpu_custom_call.1} parent=1 // loop_footer_branch
      %16 = sbr.rel target = $region3
    $region8: #{tpu_custom_call.1} parent=1 // loop_exit
      _
    %276 = vsyncpa [#allocation3], 1
    %s277 = scalar_lea.sflag [#allocation3], 1
    %278 = vsyncpa %s277, 1
    %279 = vsyncpa [#allocation6], 1
    %s280 = scalar_lea.sflag [#allocation6], 1
    %281 = vsyncpa %s280, 1
    %282 = vsyncpa [#allocation4], 1
    %s283 = scalar_lea.sflag [#allocation4], 1
    %284 = vsyncpa %s283, 1

</llo_original>
